<compile_context>
chip_gen: v6e
topology: v6e:2x2x1
jax: 0.10.0
libtpu: 0.0.40
codegen_flags: <defaults>
</compile_context>

<pallas_src>
import numpy as np
import jax
import jax.numpy as jnp
from jax.experimental import pallas as pl
from jax.experimental.pallas import tpu as pltpu


# ----------------------- compile-time constant matrices ----------------------

def _pool_sel_T(hi, wi):
    """(4, hi*wi, ho*wo) 0/1.  Candidate k=(a*2+b) picks input
    (clip(2*oh-1+a), clip(2*ow-1+b)); max over the 4 candidates equals
    MaxPool2d(kernel=2, stride=2, padding=1) with -inf padding."""
    ho, wo = hi // 2 + 1, wi // 2 + 1
    out = np.zeros((4, hi * wi, ho * wo), np.float32)
    for a in (0, 1):
        for b in (0, 1):
            k = a * 2 + b
            for oh in range(ho):
                ih = min(max(2 * oh - 1 + a, 0), hi - 1)
                for ow in range(wo):
                    iw = min(max(2 * ow - 1 + b, 0), wi - 1)
                    out[k, ih * wi + iw, oh * wo + ow] = 1.0
    return out


def _up_scatter_T(hi, wi):
    """(4, hi*wi, ho*wo) 0/1.  For k=(kh*2+kw), input (ih,iw) is scattered to
    output (2*ih-1+kh, 2*iw-1+kw) — ConvTranspose2d(k=2, s=2, p=1, op=1)."""
    ho, wo = 2 * hi - 1, 2 * wi - 1
    out = np.zeros((4, hi * wi, ho * wo), np.float32)
    for kh in (0, 1):
        for kw in (0, 1):
            k = kh * 2 + kw
            for ih in range(hi):
                oh = 2 * ih - 1 + kh
                if not (0 <= oh < ho):
                    continue
                for iw in range(wi):
                    ow = 2 * iw - 1 + kw
                    if not (0 <= ow < wo):
                        continue
                    out[k, ih * wi + iw, oh * wo + ow] = 1.0
    return out


# ------------------------------- kernel --------------------------------------

def _roundtrip_kernel(x_ref, sel1_ref, sel2_ref, sc1_ref, sc2_ref,
                      cm_ref, b_ref, o_ref):
    def mm(a, b):  # bf16 MXU operands, f32 accumulate
        return jnp.dot(a.astype(jnp.bfloat16), b.astype(jnp.bfloat16),
                       preferred_element_type=jnp.float32)

    x = x_ref[...]                                   # (NC, H*W) f32, lane-dense

    # ---- MaxPool2d(2, stride=2, pad=1)  #1 : max over 4 selection matmuls
    p = mm(x, sel1_ref[0])
    for cand in (1, 2, 3):
        p = jnp.maximum(p, mm(x, sel1_ref[cand]))    # (NC, H1*W1)

    # ---- MaxPool2d  #2
    q = mm(p, sel2_ref[0])
    for cand in (1, 2, 3):
        q = jnp.maximum(q, mm(p, sel2_ref[cand]))    # (NC, H2*W2)

    bias_col = b_ref[...]                            # (NC, 1) f32

    # ---- ConvTranspose2d(C, C, 2, stride=2, pad=1, out_pad=1)  #1
    y = mm(mm(cm_ref[0], q), sc1_ref[0])
    for k in (1, 2, 3):
        y = y + mm(mm(cm_ref[k], q), sc1_ref[k])
    y = y + bias_col                                 # (NC, H3*W3)

    # ---- ConvTranspose2d  #2 (same weights/bias: module reuses self.upsample)
    z = mm(mm(cm_ref[0], y), sc2_ref[0])
    for k in (1, 2, 3):
        z = z + mm(mm(cm_ref[k], y), sc2_ref[k])
    o_ref[...] = z + bias_col                        # (NC, H4*W4), one dense store


# ------------------------------- wrapper --------------------------------------

def round_trip(x, weight, bias):
    n, c, h, w = x.shape
    h1, w1 = h // 2 + 1, w // 2 + 1                  # after pool 1
    h2, w2 = h1 // 2 + 1, w1 // 2 + 1                # after pool 2
    h3, w3 = 2 * h2 - 1, 2 * w2 - 1                  # after convT 1
    h4, w4 = 2 * h3 - 1, 2 * w3 - 1                  # after convT 2
    nc = n * c

    # compile-time constant 0/1 matrices (exact in bf16)
    sel1 = jnp.asarray(_pool_sel_T(h, w), jnp.bfloat16)       # (4, h*w,   h1*w1)
    sel2 = jnp.asarray(_pool_sel_T(h1, w1), jnp.bfloat16)     # (4, h1*w1, h2*w2)
    sc1 = jnp.asarray(_up_scatter_T(h2, w2), jnp.bfloat16)    # (4, h2*w2, h3*w3)
    sc2 = jnp.asarray(_up_scatter_T(h3, w3), jnp.bfloat16)    # (4, h3*w3, h4*w4)

    # channel-mix matrices: cm[k] = kron(I_N, W[:,:,kh,kw].T), k = kh*2+kw
    wt = weight.astype(jnp.float32)
    eye_n = jnp.eye(n, dtype=jnp.float32)
    cm = jnp.stack([jnp.kron(eye_n, wt[:, :, kh, kw].T)
                    for kh in (0, 1) for kw in (0, 1)], axis=0)   # (4, nc, nc)
    bias_col = jnp.tile(bias.astype(jnp.float32), n).reshape(nc, 1)

    x2 = x.astype(jnp.float32).reshape(nc, h * w)    # lane-dense input view

    out2 = pl.pallas_call(
        _roundtrip_kernel,
        out_shape=jax.ShapeDtypeStruct((nc, h4 * w4), jnp.float32),
        in_specs=[pl.BlockSpec(memory_space=pltpu.MemorySpace.VMEM)] * 7,
        out_specs=pl.BlockSpec(memory_space=pltpu.MemorySpace.VMEM),
    )(x2, sel1, sel2, sc1, sc2, cm, bias_col)
    # TODO(synk): for large batches, add a grid over row-blocks of N*C with
    # dimension_semantics=("parallel",) to overlap DMA/compute and use both
    # v7x TensorCores; pointless at N*C=8.
    return out2.reshape(n, c, h4, w4)


# --------------------------- plain-JAX reference -----------------------------

def _reference(x, weight, bias):
    def pool(t):
        h, w = t.shape[2], t.shape[3]
        ho, wo = h // 2 + 1, w // 2 + 1
        tp = jnp.pad(t, ((0, 0), (0, 0), (1, 1), (1, 1)),
                     constant_values=-jnp.inf)
        r = jnp.maximum(tp[:, :, 0:2 * ho:2, :], tp[:, :, 1:2 * ho:2, :])
        return jnp.maximum(r[:, :, :, 0:2 * wo:2], r[:, :, :, 1:2 * wo:2])

    def conv_t(t):
        n, c, h, w = t.shape
        ho, wo = 2 * h - 1, 2 * w - 1
        out = jnp.broadcast_to(bias.reshape(1, c, 1, 1),
                               (n, c, ho, wo)).astype(jnp.float32)
        for kh in range(2):
            for kw in range(2):
                mix = jnp.einsum('nchw,cd->ndhw', t, weight[:, :, kh, kw],
                                 precision=jax.lax.Precision.HIGHEST)
                ih0, iw0 = 1 - kh, 1 - kw
                oh0, ow0 = 2 * ih0 - 1 + kh, 2 * iw0 - 1 + kw
                out = out.at[:, :, oh0::2, ow0::2].add(mix[:, :, ih0:, iw0:])
        return out

    return conv_t(conv_t(pool(pool(x))))


# --------------------------------- main ---------------------------------------

if __name__ == "__main__":
    key = jax.random.PRNGKey(0)
    kx, kw, kb = jax.random.split(key, 3)
    N, C, H, W = 2, 4, 16, 16
    x = jax.random.normal(kx, (N, C, H, W), jnp.float32)
    weight = 0.3 * jax.random.normal(kw, (C, C, 2, 2), jnp.float32)  # (Cin,Cout,2,2)
    bias = 0.1 * jax.random.normal(kb, (C,), jnp.float32)

    out = jax.jit(round_trip)(x, weight, bias)
    out = jax.block_until_ready(out)

    ref = _reference(x, weight, bias)
    assert out.shape == (N, C, 17, 17) and out.dtype == jnp.float32
    assert bool(jnp.all(jnp.isfinite(out)))
    err = float(jnp.max(jnp.abs(out - ref)))
    scale = 1.0 + float(jnp.max(jnp.abs(ref)))
    assert err <= 2e-2 * scale, f"mismatch vs reference: max abs err {err}"
    print("KERNEL_OK")
</pallas_src>

<mosaic_0001>
module attributes {stable_mosaic.version = 11 : i64} {
  func.func @_roundtrip_kernel(%arg0: memref<8x256xf32, #tpu.memory_space<vmem>>, %arg1: memref<4x256x81xbf16, #tpu.memory_space<vmem>>, %arg2: memref<4x81x25xbf16, #tpu.memory_space<vmem>>, %arg3: memref<4x25x81xbf16, #tpu.memory_space<vmem>>, %arg4: memref<4x81x289xbf16, #tpu.memory_space<vmem>>, %arg5: memref<4x8x8xf32, #tpu.memory_space<vmem>>, %arg6: memref<8x1xf32, #tpu.memory_space<vmem>>, %arg7: memref<8x289xf32, #tpu.memory_space<vmem>>) attributes {dimension_semantics = [], scalar_prefetch = 0 : i64, scratch_operands = 0 : i64, tpu.core_type = #tpu.core_type<tc>} {
    %c0 = arith.constant 0 : index
    %c0_0 = arith.constant 0 : index
    %0 = vector.load %arg0[%c0, %c0_0] : memref<8x256xf32, #tpu.memory_space<vmem>>, vector<8x256xf32>
    %c0_1 = arith.constant 0 : index
    %c0_2 = arith.constant 0 : index
    %c0_3 = arith.constant 0 : index
    %1 = vector.load %arg1[%c0_1, %c0_2, %c0_3] : memref<4x256x81xbf16, #tpu.memory_space<vmem>>, vector<1x256x81xbf16>
    %2 = vector.shape_cast %1 : vector<1x256x81xbf16> to vector<256x81xbf16>
    %3 = arith.truncf %0 : vector<8x256xf32> to vector<8x256xbf16>
    %cst = arith.constant dense<0.000000e+00> : vector<8x81xf32>
    %4 = tpu.matmul %3, %2, %cst {dimension_numbers = #tpu.dot_dimension_numbers<[1], [0], [0], [1], [0, 0, 1, 1], [], []>} : vector<8x256xbf16>, vector<256x81xbf16>, vector<8x81xf32> -> vector<8x81xf32>
    %c1 = arith.constant 1 : index
    %c0_4 = arith.constant 0 : index
    %c0_5 = arith.constant 0 : index
    %5 = vector.load %arg1[%c1, %c0_4, %c0_5] : memref<4x256x81xbf16, #tpu.memory_space<vmem>>, vector<1x256x81xbf16>
    %6 = vector.shape_cast %5 : vector<1x256x81xbf16> to vector<256x81xbf16>
    %7 = arith.truncf %0 : vector<8x256xf32> to vector<8x256xbf16>
    %cst_6 = arith.constant dense<0.000000e+00> : vector<8x81xf32>
    %8 = tpu.matmul %7, %6, %cst_6 {dimension_numbers = #tpu.dot_dimension_numbers<[1], [0], [0], [1], [0, 0, 1, 1], [], []>} : vector<8x256xbf16>, vector<256x81xbf16>, vector<8x81xf32> -> vector<8x81xf32>
    %9 = arith.maximumf %4, %8 : vector<8x81xf32>
    %c2 = arith.constant 2 : index
    %c0_7 = arith.constant 0 : index
    %c0_8 = arith.constant 0 : index
    %10 = vector.load %arg1[%c2, %c0_7, %c0_8] : memref<4x256x81xbf16, #tpu.memory_space<vmem>>, vector<1x256x81xbf16>
    %11 = vector.shape_cast %10 : vector<1x256x81xbf16> to vector<256x81xbf16>
    %12 = arith.truncf %0 : vector<8x256xf32> to vector<8x256xbf16>
    %cst_9 = arith.constant dense<0.000000e+00> : vector<8x81xf32>
    %13 = tpu.matmul %12, %11, %cst_9 {dimension_numbers = #tpu.dot_dimension_numbers<[1], [0], [0], [1], [0, 0, 1, 1], [], []>} : vector<8x256xbf16>, vector<256x81xbf16>, vector<8x81xf32> -> vector<8x81xf32>
    %14 = arith.maximumf %9, %13 : vector<8x81xf32>
    %c3 = arith.constant 3 : index
    %c0_10 = arith.constant 0 : index
    %c0_11 = arith.constant 0 : index
    %15 = vector.load %arg1[%c3, %c0_10, %c0_11] : memref<4x256x81xbf16, #tpu.memory_space<vmem>>, vector<1x256x81xbf16>
    %16 = vector.shape_cast %15 : vector<1x256x81xbf16> to vector<256x81xbf16>
    %17 = arith.truncf %0 : vector<8x256xf32> to vector<8x256xbf16>
    %cst_12 = arith.constant dense<0.000000e+00> : vector<8x81xf32>
    %18 = tpu.matmul %17, %16, %cst_12 {dimension_numbers = #tpu.dot_dimension_numbers<[1], [0], [0], [1], [0, 0, 1, 1], [], []>} : vector<8x256xbf16>, vector<256x81xbf16>, vector<8x81xf32> -> vector<8x81xf32>
    %19 = arith.maximumf %14, %18 : vector<8x81xf32>
    %c0_13 = arith.constant 0 : index
    %c0_14 = arith.constant 0 : index
    %c0_15 = arith.constant 0 : index
    %20 = vector.load %arg2[%c0_13, %c0_14, %c0_15] : memref<4x81x25xbf16, #tpu.memory_space<vmem>>, vector<1x81x25xbf16>
    %21 = vector.shape_cast %20 : vector<1x81x25xbf16> to vector<81x25xbf16>
    %22 = arith.truncf %19 : vector<8x81xf32> to vector<8x81xbf16>
    %cst_16 = arith.constant dense<0.000000e+00> : vector<8x25xf32>
    %23 = tpu.matmul %22, %21, %cst_16 {dimension_numbers = #tpu.dot_dimension_numbers<[1], [0], [0], [1], [0, 0, 1, 1], [], []>} : vector<8x81xbf16>, vector<81x25xbf16>, vector<8x25xf32> -> vector<8x25xf32>
    %c1_17 = arith.constant 1 : index
    %c0_18 = arith.constant 0 : index
    %c0_19 = arith.constant 0 : index
    %24 = vector.load %arg2[%c1_17, %c0_18, %c0_19] : memref<4x81x25xbf16, #tpu.memory_space<vmem>>, vector<1x81x25xbf16>
    %25 = vector.shape_cast %24 : vector<1x81x25xbf16> to vector<81x25xbf16>
    %26 = arith.truncf %19 : vector<8x81xf32> to vector<8x81xbf16>
    %cst_20 = arith.constant dense<0.000000e+00> : vector<8x25xf32>
    %27 = tpu.matmul %26, %25, %cst_20 {dimension_numbers = #tpu.dot_dimension_numbers<[1], [0], [0], [1], [0, 0, 1, 1], [], []>} : vector<8x81xbf16>, vector<81x25xbf16>, vector<8x25xf32> -> vector<8x25xf32>
    %28 = arith.maximumf %23, %27 : vector<8x25xf32>
    %c2_21 = arith.constant 2 : index
    %c0_22 = arith.constant 0 : index
    %c0_23 = arith.constant 0 : index
    %29 = vector.load %arg2[%c2_21, %c0_22, %c0_23] : memref<4x81x25xbf16, #tpu.memory_space<vmem>>, vector<1x81x25xbf16>
    %30 = vector.shape_cast %29 : vector<1x81x25xbf16> to vector<81x25xbf16>
    %31 = arith.truncf %19 : vector<8x81xf32> to vector<8x81xbf16>
    %cst_24 = arith.constant dense<0.000000e+00> : vector<8x25xf32>
    %32 = tpu.matmul %31, %30, %cst_24 {dimension_numbers = #tpu.dot_dimension_numbers<[1], [0], [0], [1], [0, 0, 1, 1], [], []>} : vector<8x81xbf16>, vector<81x25xbf16>, vector<8x25xf32> -> vector<8x25xf32>
    %33 = arith.maximumf %28, %32 : vector<8x25xf32>
    %c3_25 = arith.constant 3 : index
    %c0_26 = arith.constant 0 : index
    %c0_27 = arith.constant 0 : index
    %34 = vector.load %arg2[%c3_25, %c0_26, %c0_27] : memref<4x81x25xbf16, #tpu.memory_space<vmem>>, vector<1x81x25xbf16>
    %35 = vector.shape_cast %34 : vector<1x81x25xbf16> to vector<81x25xbf16>
    %36 = arith.truncf %19 : vector<8x81xf32> to vector<8x81xbf16>
    %cst_28 = arith.constant dense<0.000000e+00> : vector<8x25xf32>
    %37 = tpu.matmul %36, %35, %cst_28 {dimension_numbers = #tpu.dot_dimension_numbers<[1], [0], [0], [1], [0, 0, 1, 1], [], []>} : vector<8x81xbf16>, vector<81x25xbf16>, vector<8x25xf32> -> vector<8x25xf32>
    %38 = arith.maximumf %33, %37 : vector<8x25xf32>
    %c0_29 = arith.constant 0 : index
    %c0_30 = arith.constant 0 : index
    %39 = vector.load %arg6[%c0_29, %c0_30] : memref<8x1xf32, #tpu.memory_space<vmem>>, vector<8x1xf32>
    %c0_31 = arith.constant 0 : index
    %c0_32 = arith.constant 0 : index
    %c0_33 = arith.constant 0 : index
    %40 = vector.load %arg5[%c0_31, %c0_32, %c0_33] : memref<4x8x8xf32, #tpu.memory_space<vmem>>, vector<1x8x8xf32>
    %41 = vector.shape_cast %40 : vector<1x8x8xf32> to vector<8x8xf32>
    %42 = arith.truncf %41 : vector<8x8xf32> to vector<8x8xbf16>
    %43 = arith.truncf %38 : vector<8x25xf32> to vector<8x25xbf16>
    %cst_34 = arith.constant dense<0.000000e+00> : vector<8x25xf32>
    %44 = tpu.matmul %42, %43, %cst_34 {dimension_numbers = #tpu.dot_dimension_numbers<[1], [0], [0], [1], [0, 0, 1, 1], [], []>} : vector<8x8xbf16>, vector<8x25xbf16>, vector<8x25xf32> -> vector<8x25xf32>
    %c0_35 = arith.constant 0 : index
    %c0_36 = arith.constant 0 : index
    %c0_37 = arith.constant 0 : index
    %45 = vector.load %arg3[%c0_35, %c0_36, %c0_37] : memref<4x25x81xbf16, #tpu.memory_space<vmem>>, vector<1x25x81xbf16>
    %46 = vector.shape_cast %45 : vector<1x25x81xbf16> to vector<25x81xbf16>
    %47 = arith.truncf %44 : vector<8x25xf32> to vector<8x25xbf16>
    %cst_38 = arith.constant dense<0.000000e+00> : vector<8x81xf32>
    %48 = tpu.matmul %47, %46, %cst_38 {dimension_numbers = #tpu.dot_dimension_numbers<[1], [0], [0], [1], [0, 0, 1, 1], [], []>} : vector<8x25xbf16>, vector<25x81xbf16>, vector<8x81xf32> -> vector<8x81xf32>
    %c1_39 = arith.constant 1 : index
    %c0_40 = arith.constant 0 : index
    %c0_41 = arith.constant 0 : index
    %49 = vector.load %arg5[%c1_39, %c0_40, %c0_41] : memref<4x8x8xf32, #tpu.memory_space<vmem>>, vector<1x8x8xf32>
    %50 = vector.shape_cast %49 : vector<1x8x8xf32> to vector<8x8xf32>
    %51 = arith.truncf %50 : vector<8x8xf32> to vector<8x8xbf16>
    %52 = arith.truncf %38 : vector<8x25xf32> to vector<8x25xbf16>
    %cst_42 = arith.constant dense<0.000000e+00> : vector<8x25xf32>
    %53 = tpu.matmul %51, %52, %cst_42 {dimension_numbers = #tpu.dot_dimension_numbers<[1], [0], [0], [1], [0, 0, 1, 1], [], []>} : vector<8x8xbf16>, vector<8x25xbf16>, vector<8x25xf32> -> vector<8x25xf32>
    %c1_43 = arith.constant 1 : index
    %c0_44 = arith.constant 0 : index
    %c0_45 = arith.constant 0 : index
    %54 = vector.load %arg3[%c1_43, %c0_44, %c0_45] : memref<4x25x81xbf16, #tpu.memory_space<vmem>>, vector<1x25x81xbf16>
    %55 = vector.shape_cast %54 : vector<1x25x81xbf16> to vector<25x81xbf16>
    %56 = arith.truncf %53 : vector<8x25xf32> to vector<8x25xbf16>
    %cst_46 = arith.constant dense<0.000000e+00> : vector<8x81xf32>
    %57 = tpu.matmul %56, %55, %cst_46 {dimension_numbers = #tpu.dot_dimension_numbers<[1], [0], [0], [1], [0, 0, 1, 1], [], []>} : vector<8x25xbf16>, vector<25x81xbf16>, vector<8x81xf32> -> vector<8x81xf32>
    %58 = arith.addf %48, %57 : vector<8x81xf32>
    %c2_47 = arith.constant 2 : index
    %c0_48 = arith.constant 0 : index
    %c0_49 = arith.constant 0 : index
    %59 = vector.load %arg5[%c2_47, %c0_48, %c0_49] : memref<4x8x8xf32, #tpu.memory_space<vmem>>, vector<1x8x8xf32>
    %60 = vector.shape_cast %59 : vector<1x8x8xf32> to vector<8x8xf32>
    %61 = arith.truncf %60 : vector<8x8xf32> to vector<8x8xbf16>
    %62 = arith.truncf %38 : vector<8x25xf32> to vector<8x25xbf16>
    %cst_50 = arith.constant dense<0.000000e+00> : vector<8x25xf32>
    %63 = tpu.matmul %61, %62, %cst_50 {dimension_numbers = #tpu.dot_dimension_numbers<[1], [0], [0], [1], [0, 0, 1, 1], [], []>} : vector<8x8xbf16>, vector<8x25xbf16>, vector<8x25xf32> -> vector<8x25xf32>
    %c2_51 = arith.constant 2 : index
    %c0_52 = arith.constant 0 : index
    %c0_53 = arith.constant 0 : index
    %64 = vector.load %arg3[%c2_51, %c0_52, %c0_53] : memref<4x25x81xbf16, #tpu.memory_space<vmem>>, vector<1x25x81xbf16>
    %65 = vector.shape_cast %64 : vector<1x25x81xbf16> to vector<25x81xbf16>
    %66 = arith.truncf %63 : vector<8x25xf32> to vector<8x25xbf16>
    %cst_54 = arith.constant dense<0.000000e+00> : vector<8x81xf32>
    %67 = tpu.matmul %66, %65, %cst_54 {dimension_numbers = #tpu.dot_dimension_numbers<[1], [0], [0], [1], [0, 0, 1, 1], [], []>} : vector<8x25xbf16>, vector<25x81xbf16>, vector<8x81xf32> -> vector<8x81xf32>
    %68 = arith.addf %58, %67 : vector<8x81xf32>
    %c3_55 = arith.constant 3 : index
    %c0_56 = arith.constant 0 : index
    %c0_57 = arith.constant 0 : index
    %69 = vector.load %arg5[%c3_55, %c0_56, %c0_57] : memref<4x8x8xf32, #tpu.memory_space<vmem>>, vector<1x8x8xf32>
    %70 = vector.shape_cast %69 : vector<1x8x8xf32> to vector<8x8xf32>
    %71 = arith.truncf %70 : vector<8x8xf32> to vector<8x8xbf16>
    %72 = arith.truncf %38 : vector<8x25xf32> to vector<8x25xbf16>
    %cst_58 = arith.constant dense<0.000000e+00> : vector<8x25xf32>
    %73 = tpu.matmul %71, %72, %cst_58 {dimension_numbers = #tpu.dot_dimension_numbers<[1], [0], [0], [1], [0, 0, 1, 1], [], []>} : vector<8x8xbf16>, vector<8x25xbf16>, vector<8x25xf32> -> vector<8x25xf32>
    %c3_59 = arith.constant 3 : index
    %c0_60 = arith.constant 0 : index
    %c0_61 = arith.constant 0 : index
    %74 = vector.load %arg3[%c3_59, %c0_60, %c0_61] : memref<4x25x81xbf16, #tpu.memory_space<vmem>>, vector<1x25x81xbf16>
    %75 = vector.shape_cast %74 : vector<1x25x81xbf16> to vector<25x81xbf16>
    %76 = arith.truncf %73 : vector<8x25xf32> to vector<8x25xbf16>
    %cst_62 = arith.constant dense<0.000000e+00> : vector<8x81xf32>
    %77 = tpu.matmul %76, %75, %cst_62 {dimension_numbers = #tpu.dot_dimension_numbers<[1], [0], [0], [1], [0, 0, 1, 1], [], []>} : vector<8x25xbf16>, vector<25x81xbf16>, vector<8x81xf32> -> vector<8x81xf32>
    %78 = arith.addf %68, %77 : vector<8x81xf32>
    %79 = vector.broadcast %39 : vector<8x1xf32> to vector<8x81xf32>
    %80 = arith.addf %78, %79 : vector<8x81xf32>
    %c0_63 = arith.constant 0 : index
    %c0_64 = arith.constant 0 : index
    %c0_65 = arith.constant 0 : index
    %81 = vector.load %arg5[%c0_63, %c0_64, %c0_65] : memref<4x8x8xf32, #tpu.memory_space<vmem>>, vector<1x8x8xf32>
    %82 = vector.shape_cast %81 : vector<1x8x8xf32> to vector<8x8xf32>
    %83 = arith.truncf %82 : vector<8x8xf32> to vector<8x8xbf16>
    %84 = arith.truncf %80 : vector<8x81xf32> to vector<8x81xbf16>
    %cst_66 = arith.constant dense<0.000000e+00> : vector<8x81xf32>
    %85 = tpu.matmul %83, %84, %cst_66 {dimension_numbers = #tpu.dot_dimension_numbers<[1], [0], [0], [1], [0, 0, 1, 1], [], []>} : vector<8x8xbf16>, vector<8x81xbf16>, vector<8x81xf32> -> vector<8x81xf32>
    %c0_67 = arith.constant 0 : index
    %c0_68 = arith.constant 0 : index
    %c0_69 = arith.constant 0 : index
    %86 = vector.load %arg4[%c0_67, %c0_68, %c0_69] : memref<4x81x289xbf16, #tpu.memory_space<vmem>>, vector<1x81x289xbf16>
    %87 = vector.shape_cast %86 : vector<1x81x289xbf16> to vector<81x289xbf16>
    %88 = arith.truncf %85 : vector<8x81xf32> to vector<8x81xbf16>
    %cst_70 = arith.constant dense<0.000000e+00> : vector<8x289xf32>
    %89 = tpu.matmul %88, %87, %cst_70 {dimension_numbers = #tpu.dot_dimension_numbers<[1], [0], [0], [1], [0, 0, 1, 1], [], []>} : vector<8x81xbf16>, vector<81x289xbf16>, vector<8x289xf32> -> vector<8x289xf32>
    %c1_71 = arith.constant 1 : index
    %c0_72 = arith.constant 0 : index
    %c0_73 = arith.constant 0 : index
    %90 = vector.load %arg5[%c1_71, %c0_72, %c0_73] : memref<4x8x8xf32, #tpu.memory_space<vmem>>, vector<1x8x8xf32>
    %91 = vector.shape_cast %90 : vector<1x8x8xf32> to vector<8x8xf32>
    %92 = arith.truncf %91 : vector<8x8xf32> to vector<8x8xbf16>
    %93 = arith.truncf %80 : vector<8x81xf32> to vector<8x81xbf16>
    %cst_74 = arith.constant dense<0.000000e+00> : vector<8x81xf32>
    %94 = tpu.matmul %92, %93, %cst_74 {dimension_numbers = #tpu.dot_dimension_numbers<[1], [0], [0], [1], [0, 0, 1, 1], [], []>} : vector<8x8xbf16>, vector<8x81xbf16>, vector<8x81xf32> -> vector<8x81xf32>
    %c1_75 = arith.constant 1 : index
    %c0_76 = arith.constant 0 : index
    %c0_77 = arith.constant 0 : index
    %95 = vector.load %arg4[%c1_75, %c0_76, %c0_77] : memref<4x81x289xbf16, #tpu.memory_space<vmem>>, vector<1x81x289xbf16>
    %96 = vector.shape_cast %95 : vector<1x81x289xbf16> to vector<81x289xbf16>
    %97 = arith.truncf %94 : vector<8x81xf32> to vector<8x81xbf16>
    %cst_78 = arith.constant dense<0.000000e+00> : vector<8x289xf32>
    %98 = tpu.matmul %97, %96, %cst_78 {dimension_numbers = #tpu.dot_dimension_numbers<[1], [0], [0], [1], [0, 0, 1, 1], [], []>} : vector<8x81xbf16>, vector<81x289xbf16>, vector<8x289xf32> -> vector<8x289xf32>
    %99 = arith.addf %89, %98 : vector<8x289xf32>
    %c2_79 = arith.constant 2 : index
    %c0_80 = arith.constant 0 : index
    %c0_81 = arith.constant 0 : index
    %100 = vector.load %arg5[%c2_79, %c0_80, %c0_81] : memref<4x8x8xf32, #tpu.memory_space<vmem>>, vector<1x8x8xf32>
    %101 = vector.shape_cast %100 : vector<1x8x8xf32> to vector<8x8xf32>
    %102 = arith.truncf %101 : vector<8x8xf32> to vector<8x8xbf16>
    %103 = arith.truncf %80 : vector<8x81xf32> to vector<8x81xbf16>
    %cst_82 = arith.constant dense<0.000000e+00> : vector<8x81xf32>
    %104 = tpu.matmul %102, %103, %cst_82 {dimension_numbers = #tpu.dot_dimension_numbers<[1], [0], [0], [1], [0, 0, 1, 1], [], []>} : vector<8x8xbf16>, vector<8x81xbf16>, vector<8x81xf32> -> vector<8x81xf32>
    %c2_83 = arith.constant 2 : index
    %c0_84 = arith.constant 0 : index
    %c0_85 = arith.constant 0 : index
    %105 = vector.load %arg4[%c2_83, %c0_84, %c0_85] : memref<4x81x289xbf16, #tpu.memory_space<vmem>>, vector<1x81x289xbf16>
    %106 = vector.shape_cast %105 : vector<1x81x289xbf16> to vector<81x289xbf16>
    %107 = arith.truncf %104 : vector<8x81xf32> to vector<8x81xbf16>
    %cst_86 = arith.constant dense<0.000000e+00> : vector<8x289xf32>
    %108 = tpu.matmul %107, %106, %cst_86 {dimension_numbers = #tpu.dot_dimension_numbers<[1], [0], [0], [1], [0, 0, 1, 1], [], []>} : vector<8x81xbf16>, vector<81x289xbf16>, vector<8x289xf32> -> vector<8x289xf32>
    %109 = arith.addf %99, %108 : vector<8x289xf32>
    %c3_87 = arith.constant 3 : index
    %c0_88 = arith.constant 0 : index
    %c0_89 = arith.constant 0 : index
    %110 = vector.load %arg5[%c3_87, %c0_88, %c0_89] : memref<4x8x8xf32, #tpu.memory_space<vmem>>, vector<1x8x8xf32>
    %111 = vector.shape_cast %110 : vector<1x8x8xf32> to vector<8x8xf32>
    %112 = arith.truncf %111 : vector<8x8xf32> to vector<8x8xbf16>
    %113 = arith.truncf %80 : vector<8x81xf32> to vector<8x81xbf16>
    %cst_90 = arith.constant dense<0.000000e+00> : vector<8x81xf32>
    %114 = tpu.matmul %112, %113, %cst_90 {dimension_numbers = #tpu.dot_dimension_numbers<[1], [0], [0], [1], [0, 0, 1, 1], [], []>} : vector<8x8xbf16>, vector<8x81xbf16>, vector<8x81xf32> -> vector<8x81xf32>
    %c3_91 = arith.constant 3 : index
    %c0_92 = arith.constant 0 : index
    %c0_93 = arith.constant 0 : index
    %115 = vector.load %arg4[%c3_91, %c0_92, %c0_93] : memref<4x81x289xbf16, #tpu.memory_space<vmem>>, vector<1x81x289xbf16>
    %116 = vector.shape_cast %115 : vector<1x81x289xbf16> to vector<81x289xbf16>
    %117 = arith.truncf %114 : vector<8x81xf32> to vector<8x81xbf16>
    %cst_94 = arith.constant dense<0.000000e+00> : vector<8x289xf32>
    %118 = tpu.matmul %117, %116, %cst_94 {dimension_numbers = #tpu.dot_dimension_numbers<[1], [0], [0], [1], [0, 0, 1, 1], [], []>} : vector<8x81xbf16>, vector<81x289xbf16>, vector<8x289xf32> -> vector<8x289xf32>
    %119 = arith.addf %109, %118 : vector<8x289xf32>
    %120 = vector.broadcast %39 : vector<8x1xf32> to vector<8x289xf32>
    %121 = arith.addf %119, %120 : vector<8x289xf32>
    %c0_95 = arith.constant 0 : index
    %c0_96 = arith.constant 0 : index
    %122 = vector.load %arg7[%c0_95, %c0_96] : memref<8x289xf32, #tpu.memory_space<vmem>>, vector<8x289xf32>
    tpu.vector_store %arg7[%c0_95, %c0_96], %121 {strides = array<i32>} : memref<8x289xf32, #tpu.memory_space<vmem>>, vector<8x289xf32>,
    return
  }
}

</mosaic_0001>

<llo_original>
// kernel: tile.0
$region0: #{tile.0}
  %s0 = inlined_call_operand.vmem [shape: f32[2,4], index: 0, kind: input, shape index: {}]
  %s1 = inlined_call_operand.vmem [shape: f32[8,1], index: 1, kind: output, shape index: {}]
  $region1: #{tile.0} parent=0
    #allocation0 [shape = 'u8[4096]{0}', space=vmem, size = 0x1000, scoped, tag = 'scoped mem for input reshape']
    %s3 = sshll.u32 1, 2
    %s4 = ssub.s32 %s3, 1
    %v5 = vld [vmem:[%s0] sm:%s4]
    %6 = vst [vmem:[#allocation0] sm:%s4] %v5
    %v7 = vld [vmem:[#allocation0] sm:$0x3]
    %vm8 = vcmask 7168
    %9 = vst.msk [vmem:[%s1] ss:$4 sm:$0x3] %vm8, %v7
    %v10 = vld [vmem:[#allocation0] sm:$0x3]
    %11 = vrot.lane.b32.xlu0 %v10, 127
    %v12 = vpop.permute.xlu0 %11
    %vm13 = vcmask 7168
    %s14 = scalar_lea.vmem %s1, 1
    %15 = vst.msk [vmem:[%s14] ss:$4 sm:$0x3] %vm13, %v12
    %v16 = vld [vmem:[#allocation0] sm:$0x3]
    %17 = vrot.lane.b32.xlu0 %v16, 126
    %v18 = vpop.permute.xlu0 %17
    %vm19 = vcmask 7168
    %s20 = scalar_lea.vmem %s1, 2
    %21 = vst.msk [vmem:[%s20] ss:$4 sm:$0x3] %vm19, %v18
    %v22 = vld [vmem:[#allocation0] sm:$0x3]
    %23 = vrot.lane.b32.xlu0 %v22, 125
    %v24 = vpop.permute.xlu0 %23
    %vm25 = vcmask 7168
    %s26 = scalar_lea.vmem %s1, 3
    %27 = vst.msk [vmem:[%s26] ss:$4 sm:$0x3] %vm25, %v24

// kernel: tile.8
$region0: #{tile.8}
  #allocation0 [shape = 's32[1]{0}', space=sflag, size = 0x4, scoped, tag = 'scoped memory for tile.8']
  %s0 = inlined_call_operand.vmem [shape: f32[4], index: 0, kind: input, shape index: {}]
  %s1 = inlined_call_operand.vmem [shape: f32[2,4], index: 1, kind: output, shape index: {}]
  // Predicated region
  $region2: #{tile.8} parent=0 // pred_check
    _
  $region3: #{tile.8} parent=0 // pred_check_branch
    %3 = sbr.rel (0) target = $region5
  $region4: #{tile.8} parent=0 // pred_region
    _
  $region5: #{tile.8} parent=0 // pred_fallthru
    _
  %v4 = vld [vmem:[%s0] ss:$0 sm:$0xff]
  %5 = vst [vmem:[%s1] sm:$0x3] %v4

</llo_original>
